<compile_context>
chip_gen: v7x
topology: tpu7x:2x2x1
jax: 0.10.0
libtpu: 0.0.40
codegen_flags: <defaults>
</compile_context>

<pallas_src>
import jax
import jax.numpy as jnp
from jax import lax
from jax.experimental import pallas as pl
from jax.experimental.pallas import tpu as pltpu

LN_EPS = 1e-5  # torch.nn.LayerNorm default


def _round_up(n, m):
    return ((n + m - 1) // m) * m


def _vmem_cap_bytes():
    """Generation-aware VMEM budget: ~0.8x physical capacity, safe fallback."""
    try:
        info = pltpu.get_tpu_info()
        cap = getattr(info, "vmem_capacity_bytes", None)
        if cap:
            return int(cap * 0.8)
    except Exception:
        pass
    return 48 << 20  # conservative default that fits v7x's 64 MiB with headroom


def _qlayer_mlp_kernel(x_ref, w0_ref, w1_ref, w2_ref, vec_ref, o_ref):
    """Whole MLP forward for one batch tile, fused in VMEM.

    x_ref:  [TB, S]          w0_ref: [S, H]
    w1_ref: [H, H]           w2_ref: [H, Ap]   (Ap = lane-padded action dim)
    vec_ref: [8, W]  rows: 0=b0, 1=b1, 2=ln_gamma, 3=ln_beta, 4=b2 (W = max(H, Ap))
    o_ref:  [TB, Ap]
    """
    wdt = w0_ref.dtype
    H = w1_ref.shape[0]
    A_pad = w2_ref.shape[1]

    vecs = vec_ref[...].astype(jnp.float32)
    b0 = vecs[0:1, :H]
    b1 = vecs[1:2, :H]
    ln_g = vecs[2:3, :H]
    ln_b = vecs[3:4, :H]
    b2 = vecs[4:5, :A_pad]

    # Linear(state -> hidden): MXU in the weights' dtype, f32 accumulation.
    h = jnp.dot(x_ref[...].astype(wdt), w0_ref[...],
                preferred_element_type=jnp.float32) + b0

    # Linear(hidden -> hidden)
    h = jnp.dot(h.astype(wdt), w1_ref[...],
                preferred_element_type=jnp.float32) + b1

    # LayerNorm(hidden) — biased variance, eps inside rsqrt (torch semantics).
    mean = jnp.mean(h, axis=-1, keepdims=True)
    var = jnp.mean(jnp.square(h - mean), axis=-1, keepdims=True)
    h = (h - mean) * lax.rsqrt(var + LN_EPS)
    h = h * ln_g + ln_b

    # ReLU
    h = jnp.maximum(h, 0.0)

    # Linear(hidden -> action), lane-dense (128-wide) output store.
    out = jnp.dot(h.astype(wdt), w2_ref[...],
                  preferred_element_type=jnp.float32) + b2
    o_ref[...] = out.astype(o_ref.dtype)


def prepare_qlayer_params(params):
    """One-time parameter padding/packing, hoisted out of the per-call path.

    params: dict with w0,b0,w1,b1,ln_g,ln_b,w2,b2 ([in,out] weights, [1,F] vectors).
    """
    w0, w1, w2 = params["w0"], params["w1"], params["w2"]
    S, H = w0.shape
    A = w2.shape[1]
    A_pad = _round_up(max(A, 128), 128)   # lane-dense output store
    W = max(H, A_pad)

    w2_p = jnp.zeros((H, A_pad), w2.dtype).at[:, :A].set(w2)

    # Pack the five tiny [1,F] vectors into one sublane-aligned (8, W) array:
    # a single DMA + single resident buffer instead of five [1,F]->[8,F] ones.
    vecs = jnp.zeros((8, W), jnp.float32)
    vecs = vecs.at[0, :H].set(params["b0"].reshape(H).astype(jnp.float32))
    vecs = vecs.at[1, :H].set(params["b1"].reshape(H).astype(jnp.float32))
    vecs = vecs.at[2, :H].set(params["ln_g"].reshape(H).astype(jnp.float32))
    vecs = vecs.at[3, :H].set(params["ln_b"].reshape(H).astype(jnp.float32))
    vecs = vecs.at[4, :A].set(params["b2"].reshape(A).astype(jnp.float32))

    return dict(w0=w0, w1=w1, w2=w2_p, vecs=vecs,
                meta=dict(S=S, H=H, A=A, A_pad=A_pad, W=W))


def qlayer_forward(x, prep, *, batch_tile=None):
    """Fused QLayer MLP forward. `prep` comes from prepare_qlayer_params()."""
    meta = prep["meta"]
    S, H, A, A_pad, W = meta["S"], meta["H"], meta["A"], meta["A_pad"], meta["W"]
    B = x.shape[0]
    assert x.shape[1] == S, (x.shape, S)

    cap = _vmem_cap_bytes()
    # Bigger tiles on the 128 MiB-VMEM generations (v5e/v6e); 512 on v7x.
    max_tile = 1024 if cap >= (80 << 20) else 512

    if batch_tile is None:
        if B <= 256:
            batch_tile = B  # single grid step, block == full array dims, no padding
        else:
            # Large batch: large tiles to amortize ~0.35us/step overhead, but
            # at least 2 grid steps so both v7x TensorCores get work.
            batch_tile = min(max_tile, _round_up(pl.cdiv(B, 2), 8))
    if batch_tile != B:
        batch_tile = _round_up(batch_tile, 8)
    B_pad = _round_up(B, batch_tile)
    grid = (B_pad // batch_tile,)

    # Batch padding only when needed (padded rows hit LayerNorm of zeros;
    # eps keeps that finite and the rows are sliced off below).
    x_p = x if B_pad == B else jnp.zeros((B_pad, S), x.dtype).at[:B].set(x)

    def nbytes(a):
        return a.size * a.dtype.itemsize

    weight_bytes = (nbytes(prep["w0"]) + nbytes(prep["w1"])
                    + nbytes(prep["w2"]) + nbytes(prep["vecs"]))
    io_tile_bytes = batch_tile * (S + A_pad) * x.dtype.itemsize
    # single-buffered resident weights + double-buffered x/out tiles + headroom
    vmem_need = weight_bytes + 2 * io_tile_bytes + (8 << 20)
    vmem_limit = int(min(cap, max(vmem_need, 32 << 20)))

    flops = 2 * B_pad * (S * H + H * H + H * A_pad) + 10 * B_pad * H
    bytes_accessed = weight_bytes + nbytes(x_p) + B_pad * A_pad * x.dtype.itemsize
    cost = pl.CostEstimate(flops=int(flops), transcendentals=int(B_pad),
                           bytes_accessed=int(bytes_accessed))

    def build_and_call(single_buffer_weights):
        def rep(shape):
            if single_buffer_weights:
                # Constant block index -> keep resident, single-buffered (no
                # pipelining benefit from double-buffering, half the VMEM).
                return pl.BlockSpec(shape, lambda i: (0,) * len(shape),
                                    pipeline_mode=pl.Buffered(1))
            return pl.BlockSpec(shape, lambda i: (0,) * len(shape))

        return pl.pallas_call(
            _qlayer_mlp_kernel,
            out_shape=jax.ShapeDtypeStruct((B_pad, A_pad), x.dtype),
            grid_spec=pltpu.PrefetchScalarGridSpec(
                num_scalar_prefetch=0,
                grid=grid,
                in_specs=[
                    pl.BlockSpec((batch_tile, S), lambda i: (i, 0)),  # x tile (streamed)
                    rep((S, H)),        # w0  (resident)
                    rep((H, H)),        # w1  (resident)
                    rep((H, A_pad)),    # w2  (resident, lane-padded)
                    rep((8, W)),        # packed b0/b1/ln_g/ln_b/b2
                ],
                out_specs=pl.BlockSpec((batch_tile, A_pad), lambda i: (i, 0)),
            ),
            compiler_params=pltpu.CompilerParams(
                dimension_semantics=("parallel",),
                vmem_limit_bytes=vmem_limit),
            cost_estimate=cost,
        )(x_p, prep["w0"], prep["w1"], prep["w2"], prep["vecs"])

    try:
        out_padded = build_and_call(single_buffer_weights=True)
    except Exception:
        # Fallback in case this JAX build rejects Buffered(1) for inputs.
        out_padded = build_and_call(single_buffer_weights=False)

    # TODO(synk): for huge B, let consumers keep the padded [B, A_pad] layout to
    # skip this slice pass; at small/medium B it is negligible.
    return out_padded[:B, :A]


def init_qlayer_params(key, state_size, action_size, hidden_size,
                       dtype=jnp.float32):
    """Deterministic init mimicking torch Linear default (U(-1/sqrt(fan_in), ..))."""
    ks = jax.random.split(key, 6)

    def linear(kw, kb, fan_in, fan_out):
        bound = 1.0 / jnp.sqrt(float(fan_in))
        w = jax.random.uniform(kw, (fan_in, fan_out), jnp.float32, -bound, bound)
        b = jax.random.uniform(kb, (1, fan_out), jnp.float32, -bound, bound)
        return w.astype(dtype), b.astype(dtype)

    w0, b0 = linear(ks[0], ks[1], state_size, hidden_size)
    w1, b1 = linear(ks[2], ks[3], hidden_size, hidden_size)
    w2, b2 = linear(ks[4], ks[5], hidden_size, action_size)
    return dict(
        w0=w0, b0=b0,
        w1=w1, b1=b1,
        ln_g=jnp.ones((1, hidden_size), jnp.float32),   # LayerNorm weight init = 1
        ln_b=jnp.zeros((1, hidden_size), jnp.float32),  # LayerNorm bias   init = 0
        w2=w2, b2=b2,
    )


def qlayer_forward_ref(x, p):
    """Pure-JAX reference for correctness check."""
    h = x @ p["w0"] + p["b0"]
    h = h @ p["w1"] + p["b1"]
    mean = jnp.mean(h, axis=-1, keepdims=True)
    var = jnp.mean(jnp.square(h - mean), axis=-1, keepdims=True)
    h = (h - mean) * lax.rsqrt(var + LN_EPS) * p["ln_g"] + p["ln_b"]
    h = jnp.maximum(h, 0.0)
    return h @ p["w2"] + p["b2"]


if __name__ == "__main__":
    # Small shapes: batch=16, state_size=32, hidden_size=128, action_size=4
    B, STATE, HIDDEN, ACTION = 16, 32, 128, 4

    key = jax.random.PRNGKey(0)
    k_x, k_p = jax.random.split(key)
    x = jax.random.normal(k_x, (B, STATE), jnp.float32)
    params = init_qlayer_params(k_p, STATE, ACTION, HIDDEN)

    # One-time prep (padding/packing hoisted off the per-call path).
    prep = prepare_qlayer_params(params)

    out = qlayer_forward(x, prep)             # batch_tile auto -> 16, grid=(1,)
    out = jax.block_until_ready(out)

    ref = qlayer_forward_ref(x, params)
    assert out.shape == (B, ACTION), out.shape
    # NOTE: if params are cast to bf16 for MXU speed, loosen this tolerance.
    assert jnp.allclose(out, ref, atol=1e-4, rtol=1e-4), "mismatch vs JAX reference"

    print("KERNEL_OK")
</pallas_src>

<mosaic_0001>
module attributes {stable_mosaic.version = 11 : i64} {
  func.func @_qlayer_mlp_kernel(%arg0: i32, %arg1: memref<16x32xf32, #tpu.memory_space<vmem>>, %arg2: memref<32x128xf32, #tpu.memory_space<vmem>>, %arg3: memref<128x128xf32, #tpu.memory_space<vmem>>, %arg4: memref<128x128xf32, #tpu.memory_space<vmem>>, %arg5: memref<8x128xf32, #tpu.memory_space<vmem>>, %arg6: memref<16x128xf32, #tpu.memory_space<vmem>>) attributes {dimension_semantics = [#tpu.dimension_semantics<parallel>], iteration_bounds = array<i64: 1>, scalar_prefetch = 0 : i64, scratch_operands = 0 : i64, tpu.core_type = #tpu.core_type<tc>, window_params = [{transform_indices = @transform_0, window_bounds = array<i64: 16, 32>}, {pipeline_mode = #tpu.pipeline_mode<synchronous>, transform_indices = @transform_1, window_bounds = array<i64: 32, 128>}, {pipeline_mode = #tpu.pipeline_mode<synchronous>, transform_indices = @transform_2, window_bounds = array<i64: 128, 128>}, {pipeline_mode = #tpu.pipeline_mode<synchronous>, transform_indices = @transform_3, window_bounds = array<i64: 128, 128>}, {pipeline_mode = #tpu.pipeline_mode<synchronous>, transform_indices = @transform_4, window_bounds = array<i64: 8, 128>}, {transform_indices = @transform_5, window_bounds = array<i64: 16, 128>}]} {
    %c0 = arith.constant 0 : index
    %c0_0 = arith.constant 0 : index
    %0 = vector.load %arg5[%c0, %c0_0] : memref<8x128xf32, #tpu.memory_space<vmem>>, vector<8x128xf32>
    %1 = vector.extract_strided_slice %0 {offsets = [0, 0], sizes = [1, 128], strides = [1, 1]} : vector<8x128xf32> to vector<1x128xf32>
    %2 = vector.extract_strided_slice %0 {offsets = [1, 0], sizes = [1, 128], strides = [1, 1]} : vector<8x128xf32> to vector<1x128xf32>
    %3 = vector.extract_strided_slice %0 {offsets = [2, 0], sizes = [1, 128], strides = [1, 1]} : vector<8x128xf32> to vector<1x128xf32>
    %4 = vector.extract_strided_slice %0 {offsets = [3, 0], sizes = [1, 128], strides = [1, 1]} : vector<8x128xf32> to vector<1x128xf32>
    %5 = vector.extract_strided_slice %0 {offsets = [4, 0], sizes = [1, 128], strides = [1, 1]} : vector<8x128xf32> to vector<1x128xf32>
    %c0_1 = arith.constant 0 : index
    %c0_2 = arith.constant 0 : index
    %6 = vector.load %arg1[%c0_1, %c0_2] : memref<16x32xf32, #tpu.memory_space<vmem>>, vector<16x32xf32>
    %c0_3 = arith.constant 0 : index
    %c0_4 = arith.constant 0 : index
    %7 = vector.load %arg2[%c0_3, %c0_4] : memref<32x128xf32, #tpu.memory_space<vmem>>, vector<32x128xf32>
    %cst = arith.constant dense<0.000000e+00> : vector<16x128xf32>
    %8 = tpu.matmul %6, %7, %cst {dimension_numbers = #tpu.dot_dimension_numbers<[1], [0], [0], [1], [0, 0, 1, 1], [], []>} : vector<16x32xf32>, vector<32x128xf32>, vector<16x128xf32> -> vector<16x128xf32>
    %9 = vector.broadcast %1 : vector<1x128xf32> to vector<16x128xf32>
    %10 = arith.addf %8, %9 : vector<16x128xf32>
    %c0_5 = arith.constant 0 : index
    %c0_6 = arith.constant 0 : index
    %11 = vector.load %arg3[%c0_5, %c0_6] : memref<128x128xf32, #tpu.memory_space<vmem>>, vector<128x128xf32>
    %cst_7 = arith.constant dense<0.000000e+00> : vector<16x128xf32>
    %12 = tpu.matmul %10, %11, %cst_7 {dimension_numbers = #tpu.dot_dimension_numbers<[1], [0], [0], [1], [0, 0, 1, 1], [], []>} : vector<16x128xf32>, vector<128x128xf32>, vector<16x128xf32> -> vector<16x128xf32>
    %13 = vector.broadcast %2 : vector<1x128xf32> to vector<16x128xf32>
    %14 = arith.addf %12, %13 : vector<16x128xf32>
    %cst_8 = arith.constant dense<0.000000e+00> : vector<16xf32>
    %15 = vector.multi_reduction <add>, %14, %cst_8 [1] : vector<16x128xf32> to vector<16xf32>
    %16 = vector.shape_cast %15 : vector<16xf32> to vector<16x1xf32>
    %cst_9 = arith.constant 1.280000e+02 : f32
    %17 = vector.broadcast %cst_9 : f32 to vector<16x1xf32>
    %18 = arith.divf %16, %17 : vector<16x1xf32>
    %19 = vector.broadcast %18 : vector<16x1xf32> to vector<16x128xf32>
    %20 = arith.subf %14, %19 : vector<16x128xf32>
    %21 = arith.mulf %20, %20 : vector<16x128xf32>
    %cst_10 = arith.constant dense<0.000000e+00> : vector<16xf32>
    %22 = vector.multi_reduction <add>, %21, %cst_10 [1] : vector<16x128xf32> to vector<16xf32>
    %23 = vector.shape_cast %22 : vector<16xf32> to vector<16x1xf32>
    %cst_11 = arith.constant 1.280000e+02 : f32
    %24 = vector.broadcast %cst_11 : f32 to vector<16x1xf32>
    %25 = arith.divf %23, %24 : vector<16x1xf32>
    %26 = vector.broadcast %18 : vector<16x1xf32> to vector<16x128xf32>
    %27 = arith.subf %14, %26 : vector<16x128xf32>
    %cst_12 = arith.constant 9.99999974E-6 : f32
    %28 = vector.broadcast %cst_12 : f32 to vector<16x1xf32>
    %29 = arith.addf %25, %28 : vector<16x1xf32>
    %30 = math.rsqrt %29 : vector<16x1xf32>
    %31 = vector.broadcast %30 : vector<16x1xf32> to vector<16x128xf32>
    %32 = arith.mulf %27, %31 : vector<16x128xf32>
    %33 = vector.broadcast %3 : vector<1x128xf32> to vector<16x128xf32>
    %34 = arith.mulf %32, %33 : vector<16x128xf32>
    %35 = vector.broadcast %4 : vector<1x128xf32> to vector<16x128xf32>
    %36 = arith.addf %34, %35 : vector<16x128xf32>
    %cst_13 = arith.constant 0.000000e+00 : f32
    %37 = vector.broadcast %cst_13 : f32 to vector<16x128xf32>
    %38 = arith.maximumf %36, %37 : vector<16x128xf32>
    %c0_14 = arith.constant 0 : index
    %c0_15 = arith.constant 0 : index
    %39 = vector.load %arg4[%c0_14, %c0_15] : memref<128x128xf32, #tpu.memory_space<vmem>>, vector<128x128xf32>
    %cst_16 = arith.constant dense<0.000000e+00> : vector<16x128xf32>
    %40 = tpu.matmul %38, %39, %cst_16 {dimension_numbers = #tpu.dot_dimension_numbers<[1], [0], [0], [1], [0, 0, 1, 1], [], []>} : vector<16x128xf32>, vector<128x128xf32>, vector<16x128xf32> -> vector<16x128xf32>
    %41 = vector.broadcast %5 : vector<1x128xf32> to vector<16x128xf32>
    %42 = arith.addf %40, %41 : vector<16x128xf32>
    %c0_17 = arith.constant 0 : index
    %c0_18 = arith.constant 0 : index
    %43 = vector.load %arg6[%c0_17, %c0_18] : memref<16x128xf32, #tpu.memory_space<vmem>>, vector<16x128xf32>
    tpu.vector_store %arg6[%c0_17, %c0_18], %42 {strides = array<i32>} : memref<16x128xf32, #tpu.memory_space<vmem>>, vector<16x128xf32>,
    return
  }
  func.func @transform_0(%arg0: i32) -> (i32, i32) {
    %c0_i32 = arith.constant 0 : i32
    %c0_i32_0 = arith.constant 0 : i32
    return %arg0, %c0_i32 : i32, i32
  }
  func.func @transform_1(%arg0: i32) -> (i32, i32) {
    %c0_i32 = arith.constant 0 : i32
    %c0_i32_0 = arith.constant 0 : i32
    %c0_i32_1 = arith.constant 0 : i32
    return %c0_i32, %c0_i32_0 : i32, i32
  }
  func.func @transform_2(%arg0: i32) -> (i32, i32) {
    %c0_i32 = arith.constant 0 : i32
    %c0_i32_0 = arith.constant 0 : i32
    %c0_i32_1 = arith.constant 0 : i32
    return %c0_i32, %c0_i32_0 : i32, i32
  }
  func.func @transform_3(%arg0: i32) -> (i32, i32) {
    %c0_i32 = arith.constant 0 : i32
    %c0_i32_0 = arith.constant 0 : i32
    %c0_i32_1 = arith.constant 0 : i32
    return %c0_i32, %c0_i32_0 : i32, i32
  }
  func.func @transform_4(%arg0: i32) -> (i32, i32) {
    %c0_i32 = arith.constant 0 : i32
    %c0_i32_0 = arith.constant 0 : i32
    %c0_i32_1 = arith.constant 0 : i32
    return %c0_i32, %c0_i32_0 : i32, i32
  }
  func.func @transform_5(%arg0: i32) -> (i32, i32) {
    %c0_i32 = arith.constant 0 : i32
    %c0_i32_0 = arith.constant 0 : i32
    return %arg0, %c0_i32 : i32, i32
  }
}

module attributes {stable_mosaic.version = 11 : i64} {
  func.func @_qlayer_mlp_kernel(%arg0: i32, %arg1: memref<16x32xf32, #tpu.memory_space<vmem>>, %arg2: memref<32x128xf32, #tpu.memory_space<vmem>>, %arg3: memref<128x128xf32, #tpu.memory_space<vmem>>, %arg4: memref<128x128xf32, #tpu.memory_space<vmem>>, %arg5: memref<8x128xf32, #tpu.memory_space<vmem>>, %arg6: memref<16x128xf32, #tpu.memory_space<vmem>>) attributes {dimension_semantics = [#tpu.dimension_semantics<parallel>], iteration_bounds = array<i64: 1>, scalar_prefetch = 0 : i64, scratch_operands = 0 : i64, tpu.core_type = #tpu.core_type<tc>, window_params = [{transform_indices = @transform_0, window_bounds = array<i64: 16, 32>}, {pipeline_mode = #tpu.pipeline_mode<synchronous>, transform_indices = @transform_1, window_bounds = array<i64: 32, 128>}, {pipeline_mode = #tpu.pipeline_mode<synchronous>, transform_indices = @transform_2, window_bounds = array<i64: 128, 128>}, {pipeline_mode = #tpu.pipeline_mode<synchronous>, transform_indices = @transform_3, window_bounds = array<i64: 128, 128>}, {pipeline_mode = #tpu.pipeline_mode<synchronous>, transform_indices = @transform_4, window_bounds = array<i64: 8, 128>}, {transform_indices = @transform_5, window_bounds = array<i64: 16, 128>}]} {
    %c0 = arith.constant 0 : index
    %c0_0 = arith.constant 0 : index
    %0 = vector.load %arg5[%c0, %c0_0] : memref<8x128xf32, #tpu.memory_space<vmem>>, vector<8x128xf32>
    %1 = vector.extract_strided_slice %0 {offsets = [0, 0], sizes = [1, 128], strides = [1, 1]} : vector<8x128xf32> to vector<1x128xf32>
    %2 = vector.extract_strided_slice %0 {offsets = [1, 0], sizes = [1, 128], strides = [1, 1]} : vector<8x128xf32> to vector<1x128xf32>
    %3 = vector.extract_strided_slice %0 {offsets = [2, 0], sizes = [1, 128], strides = [1, 1]} : vector<8x128xf32> to vector<1x128xf32>
    %4 = vector.extract_strided_slice %0 {offsets = [3, 0], sizes = [1, 128], strides = [1, 1]} : vector<8x128xf32> to vector<1x128xf32>
    %5 = vector.extract_strided_slice %0 {offsets = [4, 0], sizes = [1, 128], strides = [1, 1]} : vector<8x128xf32> to vector<1x128xf32>
    %c0_1 = arith.constant 0 : index
    %c0_2 = arith.constant 0 : index
    %6 = vector.load %arg1[%c0_1, %c0_2] : memref<16x32xf32, #tpu.memory_space<vmem>>, vector<16x32xf32>
    %c0_3 = arith.constant 0 : index
    %c0_4 = arith.constant 0 : index
    %7 = vector.load %arg2[%c0_3, %c0_4] : memref<32x128xf32, #tpu.memory_space<vmem>>, vector<32x128xf32>
    %cst = arith.constant dense<0.000000e+00> : vector<16x128xf32>
    %8 = tpu.matmul %6, %7, %cst {dimension_numbers = #tpu.dot_dimension_numbers<[1], [0], [0], [1], [0, 0, 1, 1], [], []>} : vector<16x32xf32>, vector<32x128xf32>, vector<16x128xf32> -> vector<16x128xf32>
    %9 = vector.broadcast %1 : vector<1x128xf32> to vector<16x128xf32>
    %10 = arith.addf %8, %9 : vector<16x128xf32>
    %c0_5 = arith.constant 0 : index
    %c0_6 = arith.constant 0 : index
    %11 = vector.load %arg3[%c0_5, %c0_6] : memref<128x128xf32, #tpu.memory_space<vmem>>, vector<128x128xf32>
    %cst_7 = arith.constant dense<0.000000e+00> : vector<16x128xf32>
    %12 = tpu.matmul %10, %11, %cst_7 {dimension_numbers = #tpu.dot_dimension_numbers<[1], [0], [0], [1], [0, 0, 1, 1], [], []>} : vector<16x128xf32>, vector<128x128xf32>, vector<16x128xf32> -> vector<16x128xf32>
    %13 = vector.broadcast %2 : vector<1x128xf32> to vector<16x128xf32>
    %14 = arith.addf %12, %13 : vector<16x128xf32>
    %cst_8 = arith.constant dense<0.000000e+00> : vector<16xf32>
    %15 = vector.multi_reduction <add>, %14, %cst_8 [1] : vector<16x128xf32> to vector<16xf32>
    %16 = vector.shape_cast %15 : vector<16xf32> to vector<16x1xf32>
    %cst_9 = arith.constant 1.280000e+02 : f32
    %17 = vector.broadcast %cst_9 : f32 to vector<16x1xf32>
    %18 = arith.divf %16, %17 : vector<16x1xf32>
    %19 = vector.broadcast %18 : vector<16x1xf32> to vector<16x128xf32>
    %20 = arith.subf %14, %19 : vector<16x128xf32>
    %21 = arith.mulf %20, %20 : vector<16x128xf32>
    %cst_10 = arith.constant dense<0.000000e+00> : vector<16xf32>
    %22 = vector.multi_reduction <add>, %21, %cst_10 [1] : vector<16x128xf32> to vector<16xf32>
    %23 = vector.shape_cast %22 : vector<16xf32> to vector<16x1xf32>
    %cst_11 = arith.constant 1.280000e+02 : f32
    %24 = vector.broadcast %cst_11 : f32 to vector<16x1xf32>
    %25 = arith.divf %23, %24 : vector<16x1xf32>
    %26 = vector.broadcast %18 : vector<16x1xf32> to vector<16x128xf32>
    %27 = arith.subf %14, %26 : vector<16x128xf32>
    %cst_12 = arith.constant 9.99999974E-6 : f32
    %28 = vector.broadcast %cst_12 : f32 to vector<16x1xf32>
    %29 = arith.addf %25, %28 : vector<16x1xf32>
    %30 = math.rsqrt %29 : vector<16x1xf32>
    %31 = vector.broadcast %30 : vector<16x1xf32> to vector<16x128xf32>
    %32 = arith.mulf %27, %31 : vector<16x128xf32>
    %33 = vector.broadcast %3 : vector<1x128xf32> to vector<16x128xf32>
    %34 = arith.mulf %32, %33 : vector<16x128xf32>
    %35 = vector.broadcast %4 : vector<1x128xf32> to vector<16x128xf32>
    %36 = arith.addf %34, %35 : vector<16x128xf32>
    %cst_13 = arith.constant 0.000000e+00 : f32
    %37 = vector.broadcast %cst_13 : f32 to vector<16x128xf32>
    %38 = arith.maximumf %36, %37 : vector<16x128xf32>
    %c0_14 = arith.constant 0 : index
    %c0_15 = arith.constant 0 : index
    %39 = vector.load %arg4[%c0_14, %c0_15] : memref<128x128xf32, #tpu.memory_space<vmem>>, vector<128x128xf32>
    %cst_16 = arith.constant dense<0.000000e+00> : vector<16x128xf32>
    %40 = tpu.matmul %38, %39, %cst_16 {dimension_numbers = #tpu.dot_dimension_numbers<[1], [0], [0], [1], [0, 0, 1, 1], [], []>} : vector<16x128xf32>, vector<128x128xf32>, vector<16x128xf32> -> vector<16x128xf32>
    %41 = vector.broadcast %5 : vector<1x128xf32> to vector<16x128xf32>
    %42 = arith.addf %40, %41 : vector<16x128xf32>
    %c0_17 = arith.constant 0 : index
    %c0_18 = arith.constant 0 : index
    %43 = vector.load %arg6[%c0_17, %c0_18] : memref<16x128xf32, #tpu.memory_space<vmem>>, vector<16x128xf32>
    tpu.vector_store %arg6[%c0_17, %c0_18], %42 {strides = array<i32>} : memref<16x128xf32, #tpu.memory_space<vmem>>, vector<16x128xf32>,
    return
  }
  func.func @transform_0(%arg0: i32) -> (i32, i32) {
    %c0_i32 = arith.constant 0 : i32
    %c0_i32_0 = arith.constant 0 : i32
    return %arg0, %c0_i32 : i32, i32
  }
  func.func @transform_1(%arg0: i32) -> (i32, i32) {
    %c0_i32 = arith.constant 0 : i32
    %c0_i32_0 = arith.constant 0 : i32
    %c0_i32_1 = arith.constant 0 : i32
    return %c0_i32, %c0_i32_0 : i32, i32
  }
  func.func @transform_2(%arg0: i32) -> (i32, i32) {
    %c0_i32 = arith.constant 0 : i32
    %c0_i32_0 = arith.constant 0 : i32
    %c0_i32_1 = arith.constant 0 : i32
    return %c0_i32, %c0_i32_0 : i32, i32
  }
  func.func @transform_3(%arg0: i32) -> (i32, i32) {
    %c0_i32 = arith.constant 0 : i32
    %c0_i32_0 = arith.constant 0 : i32
    %c0_i32_1 = arith.constant 0 : i32
    return %c0_i32, %c0_i32_0 : i32, i32
  }
  func.func @transform_4(%arg0: i32) -> (i32, i32) {
    %c0_i32 = arith.constant 0 : i32
    %c0_i32_0 = arith.constant 0 : i32
    %c0_i32_1 = arith.constant 0 : i32
    return %c0_i32, %c0_i32_0 : i32, i32
  }
  func.func @transform_5(%arg0: i32) -> (i32, i32) {
    %c0_i32 = arith.constant 0 : i32
    %c0_i32_0 = arith.constant 0 : i32
    return %arg0, %c0_i32 : i32, i32
  }
}

</mosaic_0001>

<llo_original>
// kernel: tpu_custom_call.1
$region0: #{tpu_custom_call.1}
  #allocation0 [shape = 'u32[]', space=smem, size = 0x4, offset = 0x4, fixed_abs, tag = 'smem constant byte address 0x4 - core index']
  #allocation1 [shape = 'u32[144,128]{1,0:T(1,128)}', space=vmem, size = 0x12000, scoped, tag = 'internal scratch']
  %s0 = inlined_call_operand.hbm [shape: f32[16,32], index: 0, kind: input, shape index: {}]
  %s1 = inlined_call_operand.hbm [shape: f32[32,128], index: 1, kind: input, shape index: {}]
  %s2 = inlined_call_operand.hbm [shape: f32[128,128], index: 2, kind: input, shape index: {}]
  %s3 = inlined_call_operand.hbm [shape: f32[128,128], index: 3, kind: input, shape index: {}]
  %s4 = inlined_call_operand.vmem [shape: f32[8,128], index: 4, kind: input, shape index: {}]
  %s5 = inlined_call_operand.hbm [shape: f32[16,128], index: 5, kind: output, shape index: {}]
  %s6 = sld [smem:[#allocation0]]
  $region46: #{tpu_custom_call.1} parent=0
    _
  %s8 = ssub.s32 1, %s6
  %s9 = scalar_select 0, %s8, %s6
  $region1: #{tpu_custom_call.1} parent=0
    #allocation2 [shape = 'u8[8192]{0}', space=vmem, size = 0x2000, scoped, tag = 'input window, operand 0, single buffered']
    #allocation3 [shape = 's32[1]{0}', space=sflag, size = 0x4, scoped, tag = 'scoped memory for tpu_custom_call.1']
    #allocation4 [shape = 's32[1]{0}', space=sflag, size = 0x4, scoped, tag = 'scoped memory for tpu_custom_call.1']
    #allocation5 [shape = 'u8[16384]{0}', space=vmem, size = 0x4000, scoped, tag = 'input window, operand 1, single buffered']
    #allocation6 [shape = 's32[1]{0}', space=sflag, size = 0x4, scoped, tag = 'scoped memory for tpu_custom_call.1']
    #allocation7 [shape = 'u8[65536]{0}', space=vmem, size = 0x10000, scoped, tag = 'input window, operand 2, single buffered']
    #allocation8 [shape = 'u8[65536]{0}', space=vmem, size = 0x10000, scoped, tag = 'input window, operand 3, single buffered']
    #allocation9 [shape = 's32[1]{0}', space=sflag, size = 0x4, scoped, tag = 'scoped memory for tpu_custom_call.1']
    #allocation10 [shape = 'u8[8192]{0}', space=vmem, size = 0x2000, scoped, tag = 'output window, operand 0, single buffered']
    %10 = vsyncpa [#allocation3], 0
    %11 = vsyncpa [#allocation6], 0
    %12 = vsyncpa [#allocation9], 0
    %13 = vsyncpa [#allocation4], 0
    // Predicated region
    $region2: #{tpu_custom_call.1} parent=1 // pred_check
      _
    $region3: #{tpu_custom_call.1} parent=1 // pred_check_branch
      %15 = sbr.rel (0) target = $region5
    $region4: #{tpu_custom_call.1} parent=1 // pred_region
      %s17 = ssub.s32 256, 256
      %18 = vsyncadd [#allocation3], %s17
      %s19 = sshll.u32 [#allocation2], 4
      %s20 = int_to_ptr.vmem [resolvable:$true] %s19
      %25 = dma.hbm_to_vmem [thread:$0]  %s0, 256, %s20, [#allocation3], 128, 128, 8
    $region5: #{tpu_custom_call.1} parent=1 // pred_fallthru
      _
    // Predicated region
    $region6: #{tpu_custom_call.1} parent=1 // pred_check
      _
    $region7: #{tpu_custom_call.1} parent=1 // pred_check_branch
      %27 = sbr.rel (0) target = $region9
    $region8: #{tpu_custom_call.1} parent=1 // pred_region
      %s29 = ssub.s32 512, 512
      %30 = vsyncadd [#allocation6], %s29
      %s31 = sshll.u32 [#allocation5], 4
      %s32 = int_to_ptr.vmem [resolvable:$true] %s31
      %37 = dma.hbm_to_vmem [thread:$0]  %s1, 512, %s32, [#allocation6], 128, 128, 8
    $region9: #{tpu_custom_call.1} parent=1 // pred_fallthru
      _
    // Predicated region
    $region10: #{tpu_custom_call.1} parent=1 // pred_check
      _
    $region11: #{tpu_custom_call.1} parent=1 // pred_check_branch
      %39 = sbr.rel (0) target = $region13
    $region12: #{tpu_custom_call.1} parent=1 // pred_region
      %s41 = ssub.s32 2048, 2048
      %42 = vsyncadd [#allocation6], %s41
      %s43 = sshll.u32 [#allocation7], 4
      %s44 = int_to_ptr.vmem [resolvable:$true] %s43
      %49 = dma.hbm_to_vmem [thread:$0]  %s2, 2048, %s44, [#allocation6], 128, 128, 8
    $region13: #{tpu_custom_call.1} parent=1 // pred_fallthru
      _
    // Predicated region
    $region14: #{tpu_custom_call.1} parent=1 // pred_check
      _
    $region15: #{tpu_custom_call.1} parent=1 // pred_check_branch
      %51 = sbr.rel (0) target = $region17
    $region16: #{tpu_custom_call.1} parent=1 // pred_region
      %s53 = ssub.s32 2048, 2048
      %54 = vsyncadd [#allocation9], %s53
      %s55 = sshll.u32 [#allocation8], 4
      %s56 = int_to_ptr.vmem [resolvable:$true] %s55
      %61 = dma.hbm_to_vmem [thread:$0]  %s3, 2048, %s56, [#allocation9], 128, 128, 8
    $region17: #{tpu_custom_call.1} parent=1 // pred_fallthru
      _
    // Predicated region
    $region18: #{tpu_custom_call.1} parent=1 // pred_check
      _
    $region19: #{tpu_custom_call.1} parent=1 // pred_check_branch
      %63 = sbr.rel (0) target = $region21
    $region20: #{tpu_custom_call.1} parent=1 // pred_region
      _
    $region21: #{tpu_custom_call.1} parent=1 // pred_fallthru
      _
    // Predicated region
    $region22: #{tpu_custom_call.1} parent=1 // pred_check
      _
    $region23: #{tpu_custom_call.1} parent=1 // pred_check_branch
      %65 = sbr.rel (0) target = $region25
    $region24: #{tpu_custom_call.1} parent=1 // pred_region
      %66 = dma.done [#allocation3], 256
    $region25: #{tpu_custom_call.1} parent=1 // pred_fallthru
      _
    // Predicated region
    $region26: #{tpu_custom_call.1} parent=1 // pred_check
      _
    $region27: #{tpu_custom_call.1} parent=1 // pred_check_branch
      %68 = sbr.rel (0) target = $region29
    $region28: #{tpu_custom_call.1} parent=1 // pred_region
      %69 = dma.done [#allocation6], 512
    $region29: #{tpu_custom_call.1} parent=1 // pred_fallthru
      _
    // Predicated region
    $region30: #{tpu_custom_call.1} parent=1 // pred_check
      _
    $region31: #{tpu_custom_call.1} parent=1 // pred_check_branch
      %71 = sbr.rel (0) target = $region33
    $region32: #{tpu_custom_call.1} parent=1 // pred_region
      %72 = dma.done [#allocation6], 2048
    $region33: #{tpu_custom_call.1} parent=1 // pred_fallthru
      _
    // Predicated region
    $region34: #{tpu_custom_call.1} parent=1 // pred_check
      _
    $region35: #{tpu_custom_call.1} parent=1 // pred_check_branch
      %74 = sbr.rel (0) target = $region37
    $region36: #{tpu_custom_call.1} parent=1 // pred_region
      %75 = dma.done [#allocation9], 2048
    $region37: #{tpu_custom_call.1} parent=1 // pred_fallthru
      _
    %v76 = vld [vmem:[%s4] sm:$0xff]
    %v77 = vld [vmem:[#allocation2] sm:$0xff]
    %v78 = vld [vmem:[#allocation2 + $0x8] sm:$0xff]
    %v79 = vld [vmem:[#allocation5] sm:$0xff]
    %v80 = vld [vmem:[#allocation5 + $0x8] sm:$0xff]
    %v81 = vld [vmem:[#allocation5 + $0x10] sm:$0xff]
    %v82 = vld [vmem:[#allocation5 + $0x18] sm:$0xff]
    %v83 = vlaneseq
    %v84 = vshrl.u32 %v83, 7
    %v85 = vsub.s32 0, %v84
    %v86 = vrot.slane %v76, %v85
    %vm87 = vcmask 261120
    %v89 = vsel %vm87, %v77, 0
    %v92 = vsel %vm87, %v78, 0
    %94 = vmatprep.subr.mxu0 0.0
    %95 = vmatpush1.msra.mxu0 %v79
    %96 = vmatprep.subr.mxu0 0.0
    %97 = vmatpush1.msra.mxu0 %v80
    %98 = vmatprep.subr.mxu0 0.0
    %99 = vmatpush1.msra.mxu0 %v81
    %100 = vmatprep.subr.mxu0 0.0
    %101 = vmatpush1.msra.mxu0 %v82
    %102 = vmatprep.subr.mxu0 0.0
    %103 = vmatpush1.msra.mxu0 0.0
    %104 = vmatprep.subr.mxu0 0.0
    %105 = vmatpush1.msra.mxu0 0.0
    %106 = vmatprep.subr.mxu0 0.0
    %107 = vmatpush1.msra.mxu0 0.0
    %108 = vmatprep.subr.mxu0 0.0
    %109 = vmatpush1.msra.mxu0 0.0
    %110 = vmatprep.subr.mxu0 0.0
    %111 = vmatpush1.msra.mxu0 0.0
    %112 = vmatprep.subr.mxu0 0.0
    %113 = vmatpush1.msra.mxu0 0.0
    %114 = vmatprep.subr.mxu0 0.0
    %115 = vmatpush1.msra.mxu0 0.0
    %116 = vmatprep.subr.mxu0 0.0
    %117 = vmatpush1.msra.mxu0 0.0
    %118 = vmatprep.subr.mxu0 0.0
    %119 = vmatpush1.msra.mxu0 0.0
    %120 = vmatprep.subr.mxu0 0.0
    %121 = vmatpush1.msra.mxu0 0.0
    %122 = vmatprep.subr.mxu0 0.0
    %123 = vmatpush1.msra.mxu0 0.0
    %124 = vmatprep.subr.mxu0 0.0
    %125 = vmatpush1.msra.mxu0 0.0
    %126 = vmatprep.subr.mxu0 0.0
    %127 = vmatpush1.msra.mxu0 0.0
    %128 = vmatprep.subr.mxu0 0.0
    %129 = vmatpush1.msra.mxu0 0.0
    %130 = vmatprep.subr.mxu0 0.0
    %131 = vmatpush1.msra.mxu0 0.0
    %132 = vmatprep.subr.mxu0 0.0
    %133 = vmatpush1.msra.mxu0 0.0
    %134 = vmatprep.subr.mxu0 0.0
    %135 = vmatpush1.msra.mxu0 0.0
    %136 = vmatprep.subr.mxu0 0.0
    %137 = vmatpush1.msra.mxu0 0.0
    %138 = vmatprep.subr.mxu0 0.0
    %139 = vmatpush1.msra.mxu0 0.0
    %140 = vmatprep.subr.mxu0 0.0
    %141 = vmatpush1.msra.mxu0 0.0
    %142 = vmatprep.subr.mxu0 0.0
    %143 = vmatpush1.msra.mxu0 0.0
    %144 = vmatprep.subr.mxu0 0.0
    %145 = vmatpush1.msra.mxu0 0.0
    %146 = vmatprep.subr.mxu0 0.0
    %147 = vmatpush1.msra.mxu0 0.0
    %148 = vmatprep.subr.mxu0 0.0
    %149 = vmatpush1.msra.mxu0 0.0
    %150 = vmatprep.subr.mxu0 0.0
    %151 = vmatpush1.msra.mxu0 0.0
    %152 = vmatprep.subr.mxu0 0.0
    %153 = vmatpush1.msra.mxu0 0.0
    %154 = vmatprep.subr.mxu0 0.0
    %155 = vmatpush1.msra.mxu0 0.0
    %156 = vmatprep.subr.mxu0 0.0
    %157 = vmatpush1.msra.mxu0 0.0
    %158 = vmatprep.mubr.f32.mxu0 0.0
    %159 = vmatmul.mubr.f32.gmra.mrb[0].mxu0 %v89
    %v160 = vpop.f32.mrb[0].mxu0
    %v161 = vadd.f32 %v86, %v160
    %v162 = vpop.f32.mrb[0].mxu0
    %163 = vmatprep.mubr.f32.mxu0 0.0
    %164 = vmatmul.mubr.f32.gmra.mrb[0].mxu0 %v92
    %v165 = vpop.f32.mrb[0].mxu0
    %v166 = vadd.f32 %v86, %v165
    %v167 = vpop.f32.mrb[0].mxu0
    %168 = vdwg.mxu0
    %v169 = vld [vmem:[#allocation7] sm:$0xff]
    %v170 = vld [vmem:[#allocation7 + $0x8] sm:$0xff]
    %v171 = vld [vmem:[#allocation7 + $0x10] sm:$0xff]
    %v172 = vld [vmem:[#allocation7 + $0x18] sm:$0xff]
    %v173 = vld [vmem:[#allocation7 + $0x20] sm:$0xff]
    %v174 = vld [vmem:[#allocation7 + $0x28] sm:$0xff]
    %v175 = vld [vmem:[#allocation7 + $0x30] sm:$0xff]
    %v176 = vld [vmem:[#allocation7 + $0x38] sm:$0xff]
    %v177 = vld [vmem:[#allocation7 + $0x40] sm:$0xff]
    %v178 = vld [vmem:[#allocation7 + $0x48] sm:$0xff]
    %v179 = vld [vmem:[#allocation7 + $0x50] sm:$0xff]
    %v180 = vld [vmem:[#allocation7 + $0x58] sm:$0xff]
    %v181 = vld [vmem:[#allocation7 + $0x60] sm:$0xff]
    %v182 = vld [vmem:[#allocation7 + $0x68] sm:$0xff]
    %v183 = vld [vmem:[#allocation7 + $0x70] sm:$0xff]
    %v184 = vld [vmem:[#allocation7 + $0x78] sm:$0xff]
    %v185 = vlaneseq
    %v186 = vshrl.u32 %v185, 7
    %v187 = vsub.s32 1, %v186
    %v188 = vrot.slane %v76, %v187
    %189 = vmatprep.subr.mxu0 0.0
    %190 = vmatpush1.msra.mxu0 %v169
    %191 = vmatprep.subr.mxu0 0.0
    %192 = vmatpush1.msra.mxu0 %v170
    %193 = vmatprep.subr.mxu0 0.0
    %194 = vmatpush1.msra.mxu0 %v171
    %195 = vmatprep.subr.mxu0 0.0
    %196 = vmatpush1.msra.mxu0 %v172
    %197 = vmatprep.subr.mxu0 0.0
    %198 = vmatpush1.msra.mxu0 %v173
    %199 = vmatprep.subr.mxu0 0.0
    %200 = vmatpush1.msra.mxu0 %v174
    %201 = vmatprep.subr.mxu0 0.0
    %202 = vmatpush1.msra.mxu0 %v175
    %203 = vmatprep.subr.mxu0 0.0
    %204 = vmatpush1.msra.mxu0 %v176
    %205 = vmatprep.subr.mxu0 0.0
    %206 = vmatpush1.msra.mxu0 %v177
    %207 = vmatprep.subr.mxu0 0.0
    %208 = vmatpush1.msra.mxu0 %v178
    %209 = vmatprep.subr.mxu0 0.0
    %210 = vmatpush1.msra.mxu0 %v179
    %211 = vmatprep.subr.mxu0 0.0
    %212 = vmatpush1.msra.mxu0 %v180
    %213 = vmatprep.subr.mxu0 0.0
    %214 = vmatpush1.msra.mxu0 %v181
    %215 = vmatprep.subr.mxu0 0.0
    %216 = vmatpush1.msra.mxu0 %v182
    %217 = vmatprep.subr.mxu0 0.0
    %218 = vmatpush1.msra.mxu0 %v183
    %219 = vmatprep.subr.mxu0 0.0
    %220 = vmatpush1.msra.mxu0 %v184
    %221 = vmatprep.subr.mxu0 0.0
    %222 = vmatpush1.msra.mxu0 0.0
    %223 = vmatprep.subr.mxu0 0.0
    %224 = vmatpush1.msra.mxu0 0.0
    %225 = vmatprep.subr.mxu0 0.0
    %226 = vmatpush1.msra.mxu0 0.0
    %227 = vmatprep.subr.mxu0 0.0
    %228 = vmatpush1.msra.mxu0 0.0
    %229 = vmatprep.subr.mxu0 0.0
    %230 = vmatpush1.msra.mxu0 0.0
    %231 = vmatprep.subr.mxu0 0.0
    %232 = vmatpush1.msra.mxu0 0.0
    %233 = vmatprep.subr.mxu0 0.0
    %234 = vmatpush1.msra.mxu0 0.0
    %235 = vmatprep.subr.mxu0 0.0
    %236 = vmatpush1.msra.mxu0 0.0
    %237 = vmatprep.subr.mxu0 0.0
    %238 = vmatpush1.msra.mxu0 0.0
    %239 = vmatprep.subr.mxu0 0.0
    %240 = vmatpush1.msra.mxu0 0.0
    %241 = vmatprep.subr.mxu0 0.0
    %242 = vmatpush1.msra.mxu0 0.0
    %243 = vmatprep.subr.mxu0 0.0
    %244 = vmatpush1.msra.mxu0 0.0
    %245 = vmatprep.subr.mxu0 0.0
    %246 = vmatpush1.msra.mxu0 0.0
    %247 = vmatprep.subr.mxu0 0.0
    %248 = vmatpush1.msra.mxu0 0.0
    %249 = vmatprep.subr.mxu0 0.0
    %250 = vmatpush1.msra.mxu0 0.0
    %251 = vmatprep.subr.mxu0 0.0
    %252 = vmatpush1.msra.mxu0 0.0
    %253 = vmatprep.mubr.f32.mxu0 0.0
    %254 = vmatmul.mubr.f32.gmra.mrb[0].mxu0 %v161
    %v255 = vpop.f32.mrb[0].mxu0
    %v256 = vadd.f32 %v188, %v255
    %v257 = vpop.f32.mrb[0].mxu0
    %258 = vmatprep.mubr.f32.mxu0 0.0
    %259 = vmatmul.mubr.f32.gmra.mrb[0].mxu0 %v166
    %v260 = vpop.f32.mrb[0].mxu0
    %v261 = vadd.f32 %v188, %v260
    %v262 = vpop.f32.mrb[0].mxu0
    %263 = vdwg.mxu0
    %264 = vadd.xlane.f32.xlu0 %v256
    %v265 = vpop.xlane.xlu0 %264
    %266 = vadd.xlane.f32.xlu0 %v261
    %v267 = vpop.xlane.xlu0 %266
    %v268 = vrcp.pop 128.0
    %v269 = vmul.f32 %v265, %v268
    %v270 = vmul.f32 %v267, %v268
    %v271 = vsub.f32 %v256, %v269
    %v272 = vsub.f32 %v261, %v270
    %v273 = vmul.f32 %v271, %v271
    %v274 = vmul.f32 %v272, %v272
    %275 = vadd.xlane.f32.xlu0 %v273
    %v276 = vpop.xlane.xlu0 %275
    %277 = vadd.xlane.f32.xlu0 %v274
    %v278 = vpop.xlane.xlu0 %277
    %v279 = vmul.f32 %v276, %v268
    %v280 = vmul.f32 %v278, %v268
    %v281 = vadd.f32 %v279, 1e-05
    %v282 = vadd.f32 %v280, 1e-05
    %v283 = vrsqrt.pop %v281
    %v284 = vrsqrt.pop %v282
    %v285 = vmul.f32 %v271, %v283
    %v286 = vmul.f32 %v272, %v284
    %v287 = vlaneseq
    %v288 = vshrl.u32 %v287, 7
    %v289 = vsub.s32 2, %v288
    %v290 = vrot.slane %v76, %v289
    %v291 = vmul.f32 %v285, %v290
    %v292 = vmul.f32 %v286, %v290
    %v293 = vlaneseq
    %v294 = vshrl.u32 %v293, 7
    %v295 = vsub.s32 3, %v294
    %v296 = vrot.slane %v76, %v295
    %v297 = vadd.f32 %v291, %v296
    %v298 = vadd.f32 %v292, %v296
    %v299 = vmax.f32 %v297, 0.0
    %v300 = vmax.f32 %v298, 0.0
    %v301 = vld [vmem:[#allocation8] sm:$0xff]
    %v302 = vld [vmem:[#allocation8 + $0x8] sm:$0xff]
    %v303 = vld [vmem:[#allocation8 + $0x10] sm:$0xff]
    %v304 = vld [vmem:[#allocation8 + $0x18] sm:$0xff]
    %v305 = vld [vmem:[#allocation8 + $0x20] sm:$0xff]
    %v306 = vld [vmem:[#allocation8 + $0x28] sm:$0xff]
    %v307 = vld [vmem:[#allocation8 + $0x30] sm:$0xff]
    %v308 = vld [vmem:[#allocation8 + $0x38] sm:$0xff]
    %v309 = vld [vmem:[#allocation8 + $0x40] sm:$0xff]
    %v310 = vld [vmem:[#allocation8 + $0x48] sm:$0xff]
    %v311 = vld [vmem:[#allocation8 + $0x50] sm:$0xff]
    %v312 = vld [vmem:[#allocation8 + $0x58] sm:$0xff]
    %v313 = vld [vmem:[#allocation8 + $0x60] sm:$0xff]
    %v314 = vld [vmem:[#allocation8 + $0x68] sm:$0xff]
    %v315 = vld [vmem:[#allocation8 + $0x70] sm:$0xff]
    %v316 = vld [vmem:[#allocation8 + $0x78] sm:$0xff]
    %v317 = vlaneseq
    %v318 = vshrl.u32 %v317, 7
    %v319 = vsub.s32 4, %v318
    %v320 = vrot.slane %v76, %v319
    %321 = vmatprep.subr.mxu0 0.0
    %322 = vmatpush1.msra.mxu0 %v301
    %323 = vmatprep.subr.mxu0 0.0
    %324 = vmatpush1.msra.mxu0 %v302
    %325 = vmatprep.subr.mxu0 0.0
    %326 = vmatpush1.msra.mxu0 %v303
    %327 = vmatprep.subr.mxu0 0.0
    %328 = vmatpush1.msra.mxu0 %v304
    %329 = vmatprep.subr.mxu0 0.0
    %330 = vmatpush1.msra.mxu0 %v305
    %331 = vmatprep.subr.mxu0 0.0
    %332 = vmatpush1.msra.mxu0 %v306
    %333 = vmatprep.subr.mxu0 0.0
    %334 = vmatpush1.msra.mxu0 %v307
    %335 = vmatprep.subr.mxu0 0.0
    %336 = vmatpush1.msra.mxu0 %v308
    %337 = vmatprep.subr.mxu0 0.0
    %338 = vmatpush1.msra.mxu0 %v309
    %339 = vmatprep.subr.mxu0 0.0
    %340 = vmatpush1.msra.mxu0 %v310
    %341 = vmatprep.subr.mxu0 0.0
    %342 = vmatpush1.msra.mxu0 %v311
    %343 = vmatprep.subr.mxu0 0.0
    %344 = vmatpush1.msra.mxu0 %v312
    %345 = vmatprep.subr.mxu0 0.0
    %346 = vmatpush1.msra.mxu0 %v313
    %347 = vmatprep.subr.mxu0 0.0
    %348 = vmatpush1.msra.mxu0 %v314
    %349 = vmatprep.subr.mxu0 0.0
    %350 = vmatpush1.msra.mxu0 %v315
    %351 = vmatprep.subr.mxu0 0.0
    %352 = vmatpush1.msra.mxu0 %v316
    %353 = vmatprep.subr.mxu0 0.0
    %354 = vmatpush1.msra.mxu0 0.0
    %355 = vmatprep.subr.mxu0 0.0
    %356 = vmatpush1.msra.mxu0 0.0
    %357 = vmatprep.subr.mxu0 0.0
    %358 = vmatpush1.msra.mxu0 0.0
    %359 = vmatprep.subr.mxu0 0.0
    %360 = vmatpush1.msra.mxu0 0.0
    %361 = vmatprep.subr.mxu0 0.0
    %362 = vmatpush1.msra.mxu0 0.0
    %363 = vmatprep.subr.mxu0 0.0
    %364 = vmatpush1.msra.mxu0 0.0
    %365 = vmatprep.subr.mxu0 0.0
    %366 = vmatpush1.msra.mxu0 0.0
    %367 = vmatprep.subr.mxu0 0.0
    %368 = vmatpush1.msra.mxu0 0.0
    %369 = vmatprep.subr.mxu0 0.0
    %370 = vmatpush1.msra.mxu0 0.0
    %371 = vmatprep.subr.mxu0 0.0
    %372 = vmatpush1.msra.mxu0 0.0
    %373 = vmatprep.subr.mxu0 0.0
    %374 = vmatpush1.msra.mxu0 0.0
    %375 = vmatprep.subr.mxu0 0.0
    %376 = vmatpush1.msra.mxu0 0.0
    %377 = vmatprep.subr.mxu0 0.0
    %378 = vmatpush1.msra.mxu0 0.0
    %379 = vmatprep.subr.mxu0 0.0
    %380 = vmatpush1.msra.mxu0 0.0
    %381 = vmatprep.subr.mxu0 0.0
    %382 = vmatpush1.msra.mxu0 0.0
    %383 = vmatprep.subr.mxu0 0.0
    %384 = vmatpush1.msra.mxu0 0.0
    %385 = vmatprep.mubr.f32.mxu0 0.0
    %386 = vmatmul.mubr.f32.gmra.mrb[0].mxu0 %v299
    %v387 = vpop.f32.mrb[0].mxu0
    %v388 = vadd.f32 %v320, %v387
    %v389 = vpop.f32.mrb[0].mxu0
    %390 = vmatprep.mubr.f32.mxu0 0.0
    %391 = vmatmul.mubr.f32.gmra.mrb[0].mxu0 %v300
    %v392 = vpop.f32.mrb[0].mxu0
    %v393 = vadd.f32 %v320, %v392
    %v394 = vpop.f32.mrb[0].mxu0
    %395 = vdwg.mxu0
    %396 = vst [vmem:[#allocation10] sm:$0xff] %v388
    %397 = vst [vmem:[#allocation10 + $0x8] sm:$0xff] %v393
    // Predicated region
    $region38: #{tpu_custom_call.1} parent=1 // pred_check
      _
    $region39: #{tpu_custom_call.1} parent=1 // pred_check_branch
      %399 = sbr.rel (0) target = $region41
    $region40: #{tpu_custom_call.1} parent=1 // pred_region
      %s401 = ssub.s32 256, 256
      %402 = vsyncadd [#allocation4], %s401
      %s403 = sshll.u32 [#allocation10], 4
      %s404 = int_to_ptr.vmem [resolvable:$true] %s403
      %409 = dma.vmem_to_hbm [thread:$0]  %s404, 256, %s5, [#allocation4], 128, 128, 8
    $region41: #{tpu_custom_call.1} parent=1 // pred_fallthru
      _
    // Predicated region
    $region42: #{tpu_custom_call.1} parent=1 // pred_check
      _
    $region43: #{tpu_custom_call.1} parent=1 // pred_check_branch
      %411 = sbr.rel (0) target = $region45
    $region44: #{tpu_custom_call.1} parent=1 // pred_region
      %412 = dma.done [#allocation4], 256
    $region45: #{tpu_custom_call.1} parent=1 // pred_fallthru
      _
    %413 = vsyncpa [#allocation3], 1
    %414 = vsyncpa [#allocation6], 1
    %415 = vsyncpa [#allocation9], 1
    %416 = vsyncpa [#allocation4], 1

// kernel: tpu_custom_call.1
$region0: #{tpu_custom_call.1}
  #allocation0 [shape = 'u32[]', space=smem, size = 0x4, offset = 0x4, fixed_abs, tag = 'smem constant byte address 0x4 - core index']
  #allocation1 [shape = 'u32[144,128]{1,0:T(1,128)}', space=vmem, size = 0x12000, scoped, tag = 'internal scratch']
  %s0 = inlined_call_operand.hbm [shape: f32[16,32], index: 0, kind: input, shape index: {}]
  %s1 = inlined_call_operand.hbm [shape: f32[32,128], index: 1, kind: input, shape index: {}]
  %s2 = inlined_call_operand.hbm [shape: f32[128,128], index: 2, kind: input, shape index: {}]
  %s3 = inlined_call_operand.hbm [shape: f32[128,128], index: 3, kind: input, shape index: {}]
  %s4 = inlined_call_operand.vmem [shape: f32[8,128], index: 4, kind: input, shape index: {}]
  %s5 = inlined_call_operand.hbm [shape: f32[16,128], index: 5, kind: output, shape index: {}]
  %s6 = sld [smem:[#allocation0]]
  $region46: #{tpu_custom_call.1} parent=0
    _
  %s8 = ssub.s32 1, %s6
  %s9 = scalar_select 0, %s8, %s6
  $region1: #{tpu_custom_call.1} parent=0
    #allocation2 [shape = 'u8[8192]{0}', space=vmem, size = 0x2000, scoped, tag = 'input window, operand 0, single buffered']
    #allocation3 [shape = 's32[1]{0}', space=sflag, size = 0x4, scoped, tag = 'scoped memory for tpu_custom_call.1']
    #allocation4 [shape = 's32[1]{0}', space=sflag, size = 0x4, scoped, tag = 'scoped memory for tpu_custom_call.1']
    #allocation5 [shape = 'u8[16384]{0}', space=vmem, size = 0x4000, scoped, tag = 'input window, operand 1, single buffered']
    #allocation6 [shape = 's32[1]{0}', space=sflag, size = 0x4, scoped, tag = 'scoped memory for tpu_custom_call.1']
    #allocation7 [shape = 'u8[65536]{0}', space=vmem, size = 0x10000, scoped, tag = 'input window, operand 2, single buffered']
    #allocation8 [shape = 'u8[65536]{0}', space=vmem, size = 0x10000, scoped, tag = 'input window, operand 3, single buffered']
    #allocation9 [shape = 's32[1]{0}', space=sflag, size = 0x4, scoped, tag = 'scoped memory for tpu_custom_call.1']
    #allocation10 [shape = 'u8[8192]{0}', space=vmem, size = 0x2000, scoped, tag = 'output window, operand 0, single buffered']
    %10 = vsyncpa [#allocation3], 0
    %11 = vsyncpa [#allocation6], 0
    %12 = vsyncpa [#allocation9], 0
    %13 = vsyncpa [#allocation4], 0
    // Predicated region
    $region2: #{tpu_custom_call.1} parent=1 // pred_check
      _
    $region3: #{tpu_custom_call.1} parent=1 // pred_check_branch
      %15 = sbr.rel (0) target = $region5
    $region4: #{tpu_custom_call.1} parent=1 // pred_region
      %s17 = ssub.s32 256, 256
      %18 = vsyncadd [#allocation3], %s17
      %s19 = sshll.u32 [#allocation2], 4
      %s20 = int_to_ptr.vmem [resolvable:$true] %s19
      %25 = dma.hbm_to_vmem [thread:$0]  %s0, 256, %s20, [#allocation3], 128, 128, 8
    $region5: #{tpu_custom_call.1} parent=1 // pred_fallthru
      _
    // Predicated region
    $region6: #{tpu_custom_call.1} parent=1 // pred_check
      _
    $region7: #{tpu_custom_call.1} parent=1 // pred_check_branch
      %27 = sbr.rel (0) target = $region9
    $region8: #{tpu_custom_call.1} parent=1 // pred_region
      %s29 = ssub.s32 512, 512
      %30 = vsyncadd [#allocation6], %s29
      %s31 = sshll.u32 [#allocation5], 4
      %s32 = int_to_ptr.vmem [resolvable:$true] %s31
      %37 = dma.hbm_to_vmem [thread:$0]  %s1, 512, %s32, [#allocation6], 128, 128, 8
    $region9: #{tpu_custom_call.1} parent=1 // pred_fallthru
      _
    // Predicated region
    $region10: #{tpu_custom_call.1} parent=1 // pred_check
      _
    $region11: #{tpu_custom_call.1} parent=1 // pred_check_branch
      %39 = sbr.rel (0) target = $region13
    $region12: #{tpu_custom_call.1} parent=1 // pred_region
      %s41 = ssub.s32 2048, 2048
      %42 = vsyncadd [#allocation6], %s41
      %s43 = sshll.u32 [#allocation7], 4
      %s44 = int_to_ptr.vmem [resolvable:$true] %s43
      %49 = dma.hbm_to_vmem [thread:$0]  %s2, 2048, %s44, [#allocation6], 128, 128, 8
    $region13: #{tpu_custom_call.1} parent=1 // pred_fallthru
      _
    // Predicated region
    $region14: #{tpu_custom_call.1} parent=1 // pred_check
      _
    $region15: #{tpu_custom_call.1} parent=1 // pred_check_branch
      %51 = sbr.rel (0) target = $region17
    $region16: #{tpu_custom_call.1} parent=1 // pred_region
      %s53 = ssub.s32 2048, 2048
      %54 = vsyncadd [#allocation9], %s53
      %s55 = sshll.u32 [#allocation8], 4
      %s56 = int_to_ptr.vmem [resolvable:$true] %s55
      %61 = dma.hbm_to_vmem [thread:$0]  %s3, 2048, %s56, [#allocation9], 128, 128, 8
    $region17: #{tpu_custom_call.1} parent=1 // pred_fallthru
      _
    // Predicated region
    $region18: #{tpu_custom_call.1} parent=1 // pred_check
      _
    $region19: #{tpu_custom_call.1} parent=1 // pred_check_branch
      %63 = sbr.rel (0) target = $region21
    $region20: #{tpu_custom_call.1} parent=1 // pred_region
      _
    $region21: #{tpu_custom_call.1} parent=1 // pred_fallthru
      _
    // Predicated region
    $region22: #{tpu_custom_call.1} parent=1 // pred_check
      _
    $region23: #{tpu_custom_call.1} parent=1 // pred_check_branch
      %65 = sbr.rel (0) target = $region25
    $region24: #{tpu_custom_call.1} parent=1 // pred_region
      %66 = dma.done [#allocation3], 256
    $region25: #{tpu_custom_call.1} parent=1 // pred_fallthru
      _
    // Predicated region
    $region26: #{tpu_custom_call.1} parent=1 // pred_check
      _
    $region27: #{tpu_custom_call.1} parent=1 // pred_check_branch
      %68 = sbr.rel (0) target = $region29
    $region28: #{tpu_custom_call.1} parent=1 // pred_region
      %69 = dma.done [#allocation6], 512
    $region29: #{tpu_custom_call.1} parent=1 // pred_fallthru
      _
    // Predicated region
    $region30: #{tpu_custom_call.1} parent=1 // pred_check
      _
    $region31: #{tpu_custom_call.1} parent=1 // pred_check_branch
      %71 = sbr.rel (0) target = $region33
    $region32: #{tpu_custom_call.1} parent=1 // pred_region
      %72 = dma.done [#allocation6], 2048
    $region33: #{tpu_custom_call.1} parent=1 // pred_fallthru
      _
    // Predicated region
    $region34: #{tpu_custom_call.1} parent=1 // pred_check
      _
    $region35: #{tpu_custom_call.1} parent=1 // pred_check_branch
      %74 = sbr.rel (0) target = $region37
    $region36: #{tpu_custom_call.1} parent=1 // pred_region
      %75 = dma.done [#allocation9], 2048
    $region37: #{tpu_custom_call.1} parent=1 // pred_fallthru
      _
    %v76 = vld [vmem:[%s4] sm:$0xff]
    %v77 = vld [vmem:[#allocation2] sm:$0xff]
    %v78 = vld [vmem:[#allocation2 + $0x8] sm:$0xff]
    %v79 = vld [vmem:[#allocation5] sm:$0xff]
    %v80 = vld [vmem:[#allocation5 + $0x8] sm:$0xff]
    %v81 = vld [vmem:[#allocation5 + $0x10] sm:$0xff]
    %v82 = vld [vmem:[#allocation5 + $0x18] sm:$0xff]
    %v83 = vlaneseq
    %v84 = vshrl.u32 %v83, 7
    %v85 = vsub.s32 0, %v84
    %v86 = vrot.slane %v76, %v85
    %vm87 = vcmask 261120
    %v89 = vsel %vm87, %v77, 0
    %v92 = vsel %vm87, %v78, 0
    %94 = vmatprep.subr.mxu0 0.0
    %95 = vmatpush1.msra.mxu0 %v79
    %96 = vmatprep.subr.mxu0 0.0
    %97 = vmatpush1.msra.mxu0 %v80
    %98 = vmatprep.subr.mxu0 0.0
    %99 = vmatpush1.msra.mxu0 %v81
    %100 = vmatprep.subr.mxu0 0.0
    %101 = vmatpush1.msra.mxu0 %v82
    %102 = vmatprep.subr.mxu0 0.0
    %103 = vmatpush1.msra.mxu0 0.0
    %104 = vmatprep.subr.mxu0 0.0
    %105 = vmatpush1.msra.mxu0 0.0
    %106 = vmatprep.subr.mxu0 0.0
    %107 = vmatpush1.msra.mxu0 0.0
    %108 = vmatprep.subr.mxu0 0.0
    %109 = vmatpush1.msra.mxu0 0.0
    %110 = vmatprep.subr.mxu0 0.0
    %111 = vmatpush1.msra.mxu0 0.0
    %112 = vmatprep.subr.mxu0 0.0
    %113 = vmatpush1.msra.mxu0 0.0
    %114 = vmatprep.subr.mxu0 0.0
    %115 = vmatpush1.msra.mxu0 0.0
    %116 = vmatprep.subr.mxu0 0.0
    %117 = vmatpush1.msra.mxu0 0.0
    %118 = vmatprep.subr.mxu0 0.0
    %119 = vmatpush1.msra.mxu0 0.0
    %120 = vmatprep.subr.mxu0 0.0
    %121 = vmatpush1.msra.mxu0 0.0
    %122 = vmatprep.subr.mxu0 0.0
    %123 = vmatpush1.msra.mxu0 0.0
    %124 = vmatprep.subr.mxu0 0.0
    %125 = vmatpush1.msra.mxu0 0.0
    %126 = vmatprep.subr.mxu0 0.0
    %127 = vmatpush1.msra.mxu0 0.0
    %128 = vmatprep.subr.mxu0 0.0
    %129 = vmatpush1.msra.mxu0 0.0
    %130 = vmatprep.subr.mxu0 0.0
    %131 = vmatpush1.msra.mxu0 0.0
    %132 = vmatprep.subr.mxu0 0.0
    %133 = vmatpush1.msra.mxu0 0.0
    %134 = vmatprep.subr.mxu0 0.0
    %135 = vmatpush1.msra.mxu0 0.0
    %136 = vmatprep.subr.mxu0 0.0
    %137 = vmatpush1.msra.mxu0 0.0
    %138 = vmatprep.subr.mxu0 0.0
    %139 = vmatpush1.msra.mxu0 0.0
    %140 = vmatprep.subr.mxu0 0.0
    %141 = vmatpush1.msra.mxu0 0.0
    %142 = vmatprep.subr.mxu0 0.0
    %143 = vmatpush1.msra.mxu0 0.0
    %144 = vmatprep.subr.mxu0 0.0
    %145 = vmatpush1.msra.mxu0 0.0
    %146 = vmatprep.subr.mxu0 0.0
    %147 = vmatpush1.msra.mxu0 0.0
    %148 = vmatprep.subr.mxu0 0.0
    %149 = vmatpush1.msra.mxu0 0.0
    %150 = vmatprep.subr.mxu0 0.0
    %151 = vmatpush1.msra.mxu0 0.0
    %152 = vmatprep.subr.mxu0 0.0
    %153 = vmatpush1.msra.mxu0 0.0
    %154 = vmatprep.subr.mxu0 0.0
    %155 = vmatpush1.msra.mxu0 0.0
    %156 = vmatprep.subr.mxu0 0.0
    %157 = vmatpush1.msra.mxu0 0.0
    %158 = vmatprep.mubr.f32.mxu0 0.0
    %159 = vmatmul.mubr.f32.gmra.mrb[0].mxu0 %v89
    %v160 = vpop.f32.mrb[0].mxu0
    %v161 = vadd.f32 %v86, %v160
    %v162 = vpop.f32.mrb[0].mxu0
    %163 = vmatprep.mubr.f32.mxu0 0.0
    %164 = vmatmul.mubr.f32.gmra.mrb[0].mxu0 %v92
    %v165 = vpop.f32.mrb[0].mxu0
    %v166 = vadd.f32 %v86, %v165
    %v167 = vpop.f32.mrb[0].mxu0
    %168 = vdwg.mxu0
    %v169 = vld [vmem:[#allocation7] sm:$0xff]
    %v170 = vld [vmem:[#allocation7 + $0x8] sm:$0xff]
    %v171 = vld [vmem:[#allocation7 + $0x10] sm:$0xff]
    %v172 = vld [vmem:[#allocation7 + $0x18] sm:$0xff]
    %v173 = vld [vmem:[#allocation7 + $0x20] sm:$0xff]
    %v174 = vld [vmem:[#allocation7 + $0x28] sm:$0xff]
    %v175 = vld [vmem:[#allocation7 + $0x30] sm:$0xff]
    %v176 = vld [vmem:[#allocation7 + $0x38] sm:$0xff]
    %v177 = vld [vmem:[#allocation7 + $0x40] sm:$0xff]
    %v178 = vld [vmem:[#allocation7 + $0x48] sm:$0xff]
    %v179 = vld [vmem:[#allocation7 + $0x50] sm:$0xff]
    %v180 = vld [vmem:[#allocation7 + $0x58] sm:$0xff]
    %v181 = vld [vmem:[#allocation7 + $0x60] sm:$0xff]
    %v182 = vld [vmem:[#allocation7 + $0x68] sm:$0xff]
    %v183 = vld [vmem:[#allocation7 + $0x70] sm:$0xff]
    %v184 = vld [vmem:[#allocation7 + $0x78] sm:$0xff]
    %v185 = vlaneseq
    %v186 = vshrl.u32 %v185, 7
    %v187 = vsub.s32 1, %v186
    %v188 = vrot.slane %v76, %v187
    %189 = vmatprep.subr.mxu0 0.0
    %190 = vmatpush1.msra.mxu0 %v169
    %191 = vmatprep.subr.mxu0 0.0
    %192 = vmatpush1.msra.mxu0 %v170
    %193 = vmatprep.subr.mxu0 0.0
    %194 = vmatpush1.msra.mxu0 %v171
    %195 = vmatprep.subr.mxu0 0.0
    %196 = vmatpush1.msra.mxu0 %v172
    %197 = vmatprep.subr.mxu0 0.0
    %198 = vmatpush1.msra.mxu0 %v173
    %199 = vmatprep.subr.mxu0 0.0
    %200 = vmatpush1.msra.mxu0 %v174
    %201 = vmatprep.subr.mxu0 0.0
    %202 = vmatpush1.msra.mxu0 %v175
    %203 = vmatprep.subr.mxu0 0.0
    %204 = vmatpush1.msra.mxu0 %v176
    %205 = vmatprep.subr.mxu0 0.0
    %206 = vmatpush1.msra.mxu0 %v177
    %207 = vmatprep.subr.mxu0 0.0
    %208 = vmatpush1.msra.mxu0 %v178
    %209 = vmatprep.subr.mxu0 0.0
    %210 = vmatpush1.msra.mxu0 %v179
    %211 = vmatprep.subr.mxu0 0.0
    %212 = vmatpush1.msra.mxu0 %v180
    %213 = vmatprep.subr.mxu0 0.0
    %214 = vmatpush1.msra.mxu0 %v181
    %215 = vmatprep.subr.mxu0 0.0
    %216 = vmatpush1.msra.mxu0 %v182
    %217 = vmatprep.subr.mxu0 0.0
    %218 = vmatpush1.msra.mxu0 %v183
    %219 = vmatprep.subr.mxu0 0.0
    %220 = vmatpush1.msra.mxu0 %v184
    %221 = vmatprep.subr.mxu0 0.0
    %222 = vmatpush1.msra.mxu0 0.0
    %223 = vmatprep.subr.mxu0 0.0
    %224 = vmatpush1.msra.mxu0 0.0
    %225 = vmatprep.subr.mxu0 0.0
    %226 = vmatpush1.msra.mxu0 0.0
    %227 = vmatprep.subr.mxu0 0.0
    %228 = vmatpush1.msra.mxu0 0.0
    %229 = vmatprep.subr.mxu0 0.0
    %230 = vmatpush1.msra.mxu0 0.0
    %231 = vmatprep.subr.mxu0 0.0
    %232 = vmatpush1.msra.mxu0 0.0
    %233 = vmatprep.subr.mxu0 0.0
    %234 = vmatpush1.msra.mxu0 0.0
    %235 = vmatprep.subr.mxu0 0.0
    %236 = vmatpush1.msra.mxu0 0.0
    %237 = vmatprep.subr.mxu0 0.0
    %238 = vmatpush1.msra.mxu0 0.0
    %239 = vmatprep.subr.mxu0 0.0
    %240 = vmatpush1.msra.mxu0 0.0
    %241 = vmatprep.subr.mxu0 0.0
    %242 = vmatpush1.msra.mxu0 0.0
    %243 = vmatprep.subr.mxu0 0.0
    %244 = vmatpush1.msra.mxu0 0.0
    %245 = vmatprep.subr.mxu0 0.0
    %246 = vmatpush1.msra.mxu0 0.0
    %247 = vmatprep.subr.mxu0 0.0
    %248 = vmatpush1.msra.mxu0 0.0
    %249 = vmatprep.subr.mxu0 0.0
    %250 = vmatpush1.msra.mxu0 0.0
    %251 = vmatprep.subr.mxu0 0.0
    %252 = vmatpush1.msra.mxu0 0.0
    %253 = vmatprep.mubr.f32.mxu0 0.0
    %254 = vmatmul.mubr.f32.gmra.mrb[0].mxu0 %v161
    %v255 = vpop.f32.mrb[0].mxu0
    %v256 = vadd.f32 %v188, %v255
    %v257 = vpop.f32.mrb[0].mxu0
    %258 = vmatprep.mubr.f32.mxu0 0.0
    %259 = vmatmul.mubr.f32.gmra.mrb[0].mxu0 %v166
    %v260 = vpop.f32.mrb[0].mxu0
    %v261 = vadd.f32 %v188, %v260
    %v262 = vpop.f32.mrb[0].mxu0
    %263 = vdwg.mxu0
    %264 = vadd.xlane.f32.xlu0 %v256
    %v265 = vpop.xlane.xlu0 %264
    %266 = vadd.xlane.f32.xlu0 %v261
    %v267 = vpop.xlane.xlu0 %266
    %v268 = vrcp.pop 128.0
    %v269 = vmul.f32 %v265, %v268
    %v270 = vmul.f32 %v267, %v268
    %v271 = vsub.f32 %v256, %v269
    %v272 = vsub.f32 %v261, %v270
    %v273 = vmul.f32 %v271, %v271
    %v274 = vmul.f32 %v272, %v272
    %275 = vadd.xlane.f32.xlu0 %v273
    %v276 = vpop.xlane.xlu0 %275
    %277 = vadd.xlane.f32.xlu0 %v274
    %v278 = vpop.xlane.xlu0 %277
    %v279 = vmul.f32 %v276, %v268
    %v280 = vmul.f32 %v278, %v268
    %v281 = vadd.f32 %v279, 1e-05
    %v282 = vadd.f32 %v280, 1e-05
    %v283 = vrsqrt.pop %v281
    %v284 = vrsqrt.pop %v282
    %v285 = vmul.f32 %v271, %v283
    %v286 = vmul.f32 %v272, %v284
    %v287 = vlaneseq
    %v288 = vshrl.u32 %v287, 7
    %v289 = vsub.s32 2, %v288
    %v290 = vrot.slane %v76, %v289
    %v291 = vmul.f32 %v285, %v290
    %v292 = vmul.f32 %v286, %v290
    %v293 = vlaneseq
    %v294 = vshrl.u32 %v293, 7
    %v295 = vsub.s32 3, %v294
    %v296 = vrot.slane %v76, %v295
    %v297 = vadd.f32 %v291, %v296
    %v298 = vadd.f32 %v292, %v296
    %v299 = vmax.f32 %v297, 0.0
    %v300 = vmax.f32 %v298, 0.0
    %v301 = vld [vmem:[#allocation8] sm:$0xff]
    %v302 = vld [vmem:[#allocation8 + $0x8] sm:$0xff]
    %v303 = vld [vmem:[#allocation8 + $0x10] sm:$0xff]
    %v304 = vld [vmem:[#allocation8 + $0x18] sm:$0xff]
    %v305 = vld [vmem:[#allocation8 + $0x20] sm:$0xff]
    %v306 = vld [vmem:[#allocation8 + $0x28] sm:$0xff]
    %v307 = vld [vmem:[#allocation8 + $0x30] sm:$0xff]
    %v308 = vld [vmem:[#allocation8 + $0x38] sm:$0xff]
    %v309 = vld [vmem:[#allocation8 + $0x40] sm:$0xff]
    %v310 = vld [vmem:[#allocation8 + $0x48] sm:$0xff]
    %v311 = vld [vmem:[#allocation8 + $0x50] sm:$0xff]
    %v312 = vld [vmem:[#allocation8 + $0x58] sm:$0xff]
    %v313 = vld [vmem:[#allocation8 + $0x60] sm:$0xff]
    %v314 = vld [vmem:[#allocation8 + $0x68] sm:$0xff]
    %v315 = vld [vmem:[#allocation8 + $0x70] sm:$0xff]
    %v316 = vld [vmem:[#allocation8 + $0x78] sm:$0xff]
    %v317 = vlaneseq
    %v318 = vshrl.u32 %v317, 7
    %v319 = vsub.s32 4, %v318
    %v320 = vrot.slane %v76, %v319
    %321 = vmatprep.subr.mxu0 0.0
    %322 = vmatpush1.msra.mxu0 %v301
    %323 = vmatprep.subr.mxu0 0.0
    %324 = vmatpush1.msra.mxu0 %v302
    %325 = vmatprep.subr.mxu0 0.0
    %326 = vmatpush1.msra.mxu0 %v303
    %327 = vmatprep.subr.mxu0 0.0
    %328 = vmatpush1.msra.mxu0 %v304
    %329 = vmatprep.subr.mxu0 0.0
    %330 = vmatpush1.msra.mxu0 %v305
    %331 = vmatprep.subr.mxu0 0.0
    %332 = vmatpush1.msra.mxu0 %v306
    %333 = vmatprep.subr.mxu0 0.0
    %334 = vmatpush1.msra.mxu0 %v307
    %335 = vmatprep.subr.mxu0 0.0
    %336 = vmatpush1.msra.mxu0 %v308
    %337 = vmatprep.subr.mxu0 0.0
    %338 = vmatpush1.msra.mxu0 %v309
    %339 = vmatprep.subr.mxu0 0.0
    %340 = vmatpush1.msra.mxu0 %v310
    %341 = vmatprep.subr.mxu0 0.0
    %342 = vmatpush1.msra.mxu0 %v311
    %343 = vmatprep.subr.mxu0 0.0
    %344 = vmatpush1.msra.mxu0 %v312
    %345 = vmatprep.subr.mxu0 0.0
    %346 = vmatpush1.msra.mxu0 %v313
    %347 = vmatprep.subr.mxu0 0.0
    %348 = vmatpush1.msra.mxu0 %v314
    %349 = vmatprep.subr.mxu0 0.0
    %350 = vmatpush1.msra.mxu0 %v315
    %351 = vmatprep.subr.mxu0 0.0
    %352 = vmatpush1.msra.mxu0 %v316
    %353 = vmatprep.subr.mxu0 0.0
    %354 = vmatpush1.msra.mxu0 0.0
    %355 = vmatprep.subr.mxu0 0.0
    %356 = vmatpush1.msra.mxu0 0.0
    %357 = vmatprep.subr.mxu0 0.0
    %358 = vmatpush1.msra.mxu0 0.0
    %359 = vmatprep.subr.mxu0 0.0
    %360 = vmatpush1.msra.mxu0 0.0
    %361 = vmatprep.subr.mxu0 0.0
    %362 = vmatpush1.msra.mxu0 0.0
    %363 = vmatprep.subr.mxu0 0.0
    %364 = vmatpush1.msra.mxu0 0.0
    %365 = vmatprep.subr.mxu0 0.0
    %366 = vmatpush1.msra.mxu0 0.0
    %367 = vmatprep.subr.mxu0 0.0
    %368 = vmatpush1.msra.mxu0 0.0
    %369 = vmatprep.subr.mxu0 0.0
    %370 = vmatpush1.msra.mxu0 0.0
    %371 = vmatprep.subr.mxu0 0.0
    %372 = vmatpush1.msra.mxu0 0.0
    %373 = vmatprep.subr.mxu0 0.0
    %374 = vmatpush1.msra.mxu0 0.0
    %375 = vmatprep.subr.mxu0 0.0
    %376 = vmatpush1.msra.mxu0 0.0
    %377 = vmatprep.subr.mxu0 0.0
    %378 = vmatpush1.msra.mxu0 0.0
    %379 = vmatprep.subr.mxu0 0.0
    %380 = vmatpush1.msra.mxu0 0.0
    %381 = vmatprep.subr.mxu0 0.0
    %382 = vmatpush1.msra.mxu0 0.0
    %383 = vmatprep.subr.mxu0 0.0
    %384 = vmatpush1.msra.mxu0 0.0
    %385 = vmatprep.mubr.f32.mxu0 0.0
    %386 = vmatmul.mubr.f32.gmra.mrb[0].mxu0 %v299
    %v387 = vpop.f32.mrb[0].mxu0
    %v388 = vadd.f32 %v320, %v387
    %v389 = vpop.f32.mrb[0].mxu0
    %390 = vmatprep.mubr.f32.mxu0 0.0
    %391 = vmatmul.mubr.f32.gmra.mrb[0].mxu0 %v300
    %v392 = vpop.f32.mrb[0].mxu0
    %v393 = vadd.f32 %v320, %v392
    %v394 = vpop.f32.mrb[0].mxu0
    %395 = vdwg.mxu0
    %396 = vst [vmem:[#allocation10] sm:$0xff] %v388
    %397 = vst [vmem:[#allocation10 + $0x8] sm:$0xff] %v393
    // Predicated region
    $region38: #{tpu_custom_call.1} parent=1 // pred_check
      _
    $region39: #{tpu_custom_call.1} parent=1 // pred_check_branch
      %399 = sbr.rel (0) target = $region41
    $region40: #{tpu_custom_call.1} parent=1 // pred_region
      %s401 = ssub.s32 256, 256
      %402 = vsyncadd [#allocation4], %s401
      %s403 = sshll.u32 [#allocation10], 4
      %s404 = int_to_ptr.vmem [resolvable:$true] %s403
      %409 = dma.vmem_to_hbm [thread:$0]  %s404, 256, %s5, [#allocation4], 128, 128, 8
    $region41: #{tpu_custom_call.1} parent=1 // pred_fallthru
      _
    // Predicated region
    $region42: #{tpu_custom_call.1} parent=1 // pred_check
      _
    $region43: #{tpu_custom_call.1} parent=1 // pred_check_branch
      %411 = sbr.rel (0) target = $region45
    $region44: #{tpu_custom_call.1} parent=1 // pred_region
      %412 = dma.done [#allocation4], 256
    $region45: #{tpu_custom_call.1} parent=1 // pred_fallthru
      _
    %413 = vsyncpa [#allocation3], 1
    %414 = vsyncpa [#allocation6], 1
    %415 = vsyncpa [#allocation9], 1
    %416 = vsyncpa [#allocation4], 1

</llo_original>
